<compile_context>
chip_gen: v5e
topology: v5e:2x2
jax: 0.10.0
libtpu: 0.0.40
codegen_flags: <defaults>
</compile_context>

<pallas_src>
import math
from functools import partial

import jax
import jax.numpy as jnp
from jax import lax
from jax.experimental import pallas as pl
from jax.experimental.pallas import tpu as pltpu

_MIB = 1024 * 1024


def _vmem_limit_bytes() -> int:
    """Generation-aware VMEM limit: min(capacity - 8 MiB headroom, 100 MiB)."""
    cap = 64 * _MIB  # safe fallback (v7x per-TC capacity)
    try:
        info = pltpu.get_tpu_info()
        cap = int(getattr(info, "vmem_capacity_bytes", cap) or cap)
    except Exception:
        pass
    return int(min(cap - 8 * _MIB, 100 * _MIB))


_VMEM_LIMIT = _vmem_limit_bytes()


def _make_linear_kernel(*, has_bias: bool, use_scratch: bool, k_rem: int,
                        compute_dtype):
    """Build a kernel with a static signature matching (bias?, scratch?)."""

    def body(x_ref, w_ref, b_ref, o_ref, acc_ref):
        acc = acc_ref if use_scratch else o_ref      # f32 out -> accumulate in place
        k = pl.program_id(2)
        nk = pl.num_programs(2)

        @pl.when(k == 0)
        def _init():
            acc[...] = jnp.zeros_like(acc)

        x = x_ref[...]
        w = w_ref[...]
        if k_rem:
            # Last K block is partial: zero the invalid K slots of BOTH operands so
            # stale/NaN garbage from the boundary read never reaches the MXU.
            lim = jnp.where(k == nk - 1, k_rem, x.shape[-1])
            kx = lax.broadcasted_iota(jnp.int32, x.shape, 1)
            kw = lax.broadcasted_iota(jnp.int32, w.shape, 0)
            x = jnp.where(kx < lim, x, jnp.zeros_like(x))
            w = jnp.where(kw < lim, w, jnp.zeros_like(w))
        if compute_dtype is not None:
            x = x.astype(compute_dtype)
            w = w.astype(compute_dtype)

        acc[...] += jnp.dot(x, w, preferred_element_type=jnp.float32)

        if has_bias or use_scratch:
            @pl.when(k == nk - 1)
            def _finalize():
                out = acc[...]
                if has_bias:
                    out = out + b_ref[...].astype(jnp.float32)  # bias added once, in f32
                o_ref[...] = out.astype(o_ref.dtype)

    if has_bias and use_scratch:
        return lambda x, w, b, o, a: body(x, w, b, o, a)
    if has_bias:
        return lambda x, w, b, o: body(x, w, b, o, None)
    if use_scratch:
        return lambda x, w, o, a: body(x, w, None, o, a)
    return lambda x, w, o: body(x, w, None, o, None)


def prepare_weight(weight: jax.Array) -> jax.Array:
    """One-time conversion of a PyTorch-layout (out, in) weight to the (in, out)
    layout the kernel consumes.  Do this once per layer (weights are static), so
    the per-call hot path has no transpose / pad / copy."""
    return jnp.asarray(weight).T


@partial(jax.jit, static_argnames=("tm", "tn", "tk", "compute_dtype"))
def pallas_linear(x: jax.Array, w_t: jax.Array, bias: jax.Array | None = None,
                  *, tm: int = 512, tn: int = 512, tk: int = 512,
                  compute_dtype=None) -> jax.Array:
    """y = x @ w_t + bias, matching torch.nn.Linear semantics.

    x:    (..., in_features)
    w_t:  (in_features, out_features)   -- prepared once via prepare_weight()
    bias: (out_features,) or None
    """
    in_features, out_features = w_t.shape
    assert x.shape[-1] == in_features
    lead = x.shape[:-1]
    m = math.prod(lead) if lead else 1
    x2 = x.reshape(m, in_features)

    has_bias = bias is not None
    out_dtype = x.dtype
    use_scratch = jnp.dtype(out_dtype) != jnp.dtype(jnp.float32)
    itemsize = jnp.dtype(x.dtype).itemsize

    # Tile sizes: clamp to the full dim when the dim is smaller than the tile
    # (a block equal to the full array dim is always legal); otherwise the
    # defaults are (8,128)-aligned and partial boundary blocks are handled by
    # masked output stores (M/N) and in-kernel K masking (K).
    tm_ = min(tm, m)
    tn_ = min(tn, out_features)
    tk_ = min(tk, in_features)
    k_rem = in_features % tk_  # 0 when K divides the tile exactly (static)

    grid = (pl.cdiv(m, tm_), pl.cdiv(out_features, tn_), pl.cdiv(in_features, tk_))

    in_specs = [
        pl.BlockSpec((tm_, tk_), lambda i, j, k: (i, k)),   # x tile      (M, K)
        pl.BlockSpec((tk_, tn_), lambda i, j, k: (k, j)),   # weight tile (K, N)
    ]
    args = [x2, w_t]
    if has_bias:
        in_specs.append(pl.BlockSpec((1, tn_), lambda i, j, k: (0, j)))
        args.append(bias.reshape(1, out_features))

    scratch_shapes = [pltpu.VMEM((tm_, tn_), jnp.float32)] if use_scratch else []

    kernel = _make_linear_kernel(has_bias=has_bias, use_scratch=use_scratch,
                                 k_rem=k_rem, compute_dtype=compute_dtype)

    flops = 2 * m * out_features * in_features
    bytes_accessed = (x2.size * itemsize
                      + w_t.size * jnp.dtype(w_t.dtype).itemsize
                      + m * out_features * itemsize
                      + (out_features * itemsize if has_bias else 0))

    out = pl.pallas_call(
        kernel,
        out_shape=jax.ShapeDtypeStruct((m, out_features), out_dtype),
        grid_spec=pltpu.PrefetchScalarGridSpec(
            num_scalar_prefetch=0,
            grid=grid,
            in_specs=in_specs,
            out_specs=pl.BlockSpec((tm_, tn_), lambda i, j, k: (i, j)),
            scratch_shapes=scratch_shapes,
        ),
        compiler_params=pltpu.CompilerParams(
            dimension_semantics=("parallel", "parallel", "arbitrary"),
            vmem_limit_bytes=_VMEM_LIMIT,
        ),
        cost_estimate=pl.CostEstimate(flops=flops, transcendentals=0,
                                      bytes_accessed=bytes_accessed),
    )(*args)

    return out.reshape(*lead, out_features)


def init_linear_params(key, in_features: int, out_features: int, dtype=jnp.float32):
    """Xavier-uniform weight (PyTorch layout) and zero bias (matches module __init__)."""
    bound = math.sqrt(6.0 / (in_features + out_features))
    weight = jax.random.uniform(
        key, (out_features, in_features), minval=-bound, maxval=bound, dtype=dtype
    )
    bias = jnp.zeros((out_features,), dtype=dtype)
    return weight, bias


if __name__ == "__main__":
    key = jax.random.PRNGKey(0)
    k_x, k_w, k_x3, k_w3 = jax.random.split(key, 4)

    # --- main demo (shapes implied by the module forward) ---
    batch, seq, in_features, out_features = 2, 8, 32, 64
    x = jax.random.normal(k_x, (batch, seq, in_features), dtype=jnp.float32)
    weight, bias = init_linear_params(k_w, in_features, out_features)
    w_t = prepare_weight(weight)          # one-time (out,in) -> (in,out)

    y = pallas_linear(x, w_t, bias)
    jax.block_until_ready(y)
    y_ref = x @ weight.T + bias
    assert y.shape == (batch, seq, out_features)
    assert jnp.allclose(y, y_ref, atol=1e-5, rtol=1e-5)

    # --- no-bias path (static branch: no bias buffer / DMA / add) ---
    y_nb = pallas_linear(x, w_t, None)
    jax.block_until_ready(y_nb)
    assert jnp.allclose(y_nb, x @ weight.T, atol=1e-5, rtol=1e-5)

    # --- boundary path: K not a multiple of tk, M not a multiple of tm ---
    b3, s3, in3, out3 = 2, 10, 160, 96
    x3 = jax.random.normal(k_x3, (b3, s3, in3), dtype=jnp.float32)
    w3, bias3 = init_linear_params(k_w3, in3, out3)
    y3 = pallas_linear(x3, prepare_weight(w3), bias3, tm=8, tk=128)
    jax.block_until_ready(y3)
    assert jnp.allclose(y3, x3 @ w3.T + bias3, atol=1e-4, rtol=1e-4)

    print("KERNEL_OK")
</pallas_src>

<mosaic_0001>
module attributes {stable_mosaic.version = 11 : i64} {
  func.func @_lambda_(%arg0: i32, %arg1: i32, %arg2: i32, %arg3: memref<16x32xf32, #tpu.memory_space<vmem>>, %arg4: memref<32x64xf32, #tpu.memory_space<vmem>>, %arg5: memref<1x64xf32, #tpu.memory_space<vmem>>, %arg6: memref<16x64xf32, #tpu.memory_space<vmem>>) attributes {dimension_semantics = [#tpu.dimension_semantics<parallel>, #tpu.dimension_semantics<parallel>, #tpu.dimension_semantics<arbitrary>], iteration_bounds = array<i64: 1, 1, 1>, scalar_prefetch = 0 : i64, scratch_operands = 0 : i64, tpu.core_type = #tpu.core_type<tc>, window_params = [{transform_indices = @transform_0, window_bounds = array<i64: 16, 32>}, {transform_indices = @transform_1, window_bounds = array<i64: 32, 64>}, {transform_indices = @transform_2, window_bounds = array<i64: 1, 64>}, {transform_indices = @transform_3, window_bounds = array<i64: 16, 64>}]} {
    %c0_i32 = arith.constant 0 : i32
    %0 = arith.cmpi eq, %arg2, %c0_i32 : i32
    %1 = arith.extui %0 : i1 to i32
    %c0_i32_0 = arith.constant 0 : i32
    %2 = arith.cmpi ne, %1, %c0_i32_0 : i32
    scf.if %2 {
      %cst_10 = arith.constant 0.000000e+00 : f32
      %12 = vector.broadcast %cst_10 : f32 to vector<16x64xf32>
      %c0_11 = arith.constant 0 : index
      %c0_12 = arith.constant 0 : index
      %13 = vector.load %arg6[%c0_11, %c0_12] : memref<16x64xf32, #tpu.memory_space<vmem>>, vector<16x64xf32>
      tpu.vector_store %arg6[%c0_11, %c0_12], %12 {strides = array<i32>} : memref<16x64xf32, #tpu.memory_space<vmem>>, vector<16x64xf32>,
    } else {
    }
    %c0 = arith.constant 0 : index
    %c0_1 = arith.constant 0 : index
    %3 = vector.load %arg3[%c0, %c0_1] : memref<16x32xf32, #tpu.memory_space<vmem>>, vector<16x32xf32>
    %c0_2 = arith.constant 0 : index
    %c0_3 = arith.constant 0 : index
    %4 = vector.load %arg4[%c0_2, %c0_3] : memref<32x64xf32, #tpu.memory_space<vmem>>, vector<32x64xf32>
    %c0_4 = arith.constant 0 : index
    %c0_5 = arith.constant 0 : index
    %5 = vector.load %arg6[%c0_4, %c0_5] : memref<16x64xf32, #tpu.memory_space<vmem>>, vector<16x64xf32>
    %cst = arith.constant dense<0.000000e+00> : vector<16x64xf32>
    %6 = tpu.matmul %3, %4, %cst {dimension_numbers = #tpu.dot_dimension_numbers<[1], [0], [0], [1], [0, 0, 1, 1], [], []>} : vector<16x32xf32>, vector<32x64xf32>, vector<16x64xf32> -> vector<16x64xf32>
    %7 = arith.addf %5, %6 : vector<16x64xf32>
    %c0_6 = arith.constant 0 : index
    %c0_7 = arith.constant 0 : index
    %8 = vector.load %arg6[%c0_6, %c0_7] : memref<16x64xf32, #tpu.memory_space<vmem>>, vector<16x64xf32>
    tpu.vector_store %arg6[%c0_6, %c0_7], %7 {strides = array<i32>} : memref<16x64xf32, #tpu.memory_space<vmem>>, vector<16x64xf32>,
    %c0_i32_8 = arith.constant 0 : i32
    %9 = arith.cmpi eq, %arg2, %c0_i32_8 : i32
    %10 = arith.extui %9 : i1 to i32
    %c0_i32_9 = arith.constant 0 : i32
    %11 = arith.cmpi ne, %10, %c0_i32_9 : i32
    scf.if %11 {
      %c0_10 = arith.constant 0 : index
      %c0_11 = arith.constant 0 : index
      %12 = vector.load %arg6[%c0_10, %c0_11] : memref<16x64xf32, #tpu.memory_space<vmem>>, vector<16x64xf32>
      %c0_12 = arith.constant 0 : index
      %c0_13 = arith.constant 0 : index
      %13 = vector.load %arg5[%c0_12, %c0_13] : memref<1x64xf32, #tpu.memory_space<vmem>>, vector<1x64xf32>
      %14 = vector.broadcast %13 : vector<1x64xf32> to vector<16x64xf32>
      %15 = arith.addf %12, %14 : vector<16x64xf32>
      %c0_14 = arith.constant 0 : index
      %c0_15 = arith.constant 0 : index
      %16 = vector.load %arg6[%c0_14, %c0_15] : memref<16x64xf32, #tpu.memory_space<vmem>>, vector<16x64xf32>
      tpu.vector_store %arg6[%c0_14, %c0_15], %15 {strides = array<i32>} : memref<16x64xf32, #tpu.memory_space<vmem>>, vector<16x64xf32>,
    } else {
    }
    return
  }
  func.func @transform_0(%arg0: i32, %arg1: i32, %arg2: i32) -> (i32, i32) {
    %c0_i32 = arith.constant 0 : i32
    return %arg0, %arg2 : i32, i32
  }
  func.func @transform_1(%arg0: i32, %arg1: i32, %arg2: i32) -> (i32, i32) {
    %c0_i32 = arith.constant 0 : i32
    return %arg2, %arg1 : i32, i32
  }
  func.func @transform_2(%arg0: i32, %arg1: i32, %arg2: i32) -> (i32, i32) {
    %c0_i32 = arith.constant 0 : i32
    %c0_i32_0 = arith.constant 0 : i32
    return %c0_i32, %arg1 : i32, i32
  }
  func.func @transform_3(%arg0: i32, %arg1: i32, %arg2: i32) -> (i32, i32) {
    %c0_i32 = arith.constant 0 : i32
    return %arg0, %arg1 : i32, i32
  }
}

</mosaic_0001>

<llo_original>
// kernel: pallas_linear.1
$region0: #{pallas_linear.1}
  #allocation0 [shape = 'u32[]', space=smem, size = 0x4, offset = 0x4, fixed_abs, tag = 'smem constant byte address 0x4 - core index']
  #allocation1 [shape = 'u32[72,128]{1,0:T(1,128)}', space=vmem, size = 0x9000, scoped, tag = 'internal scratch']
  %s0 = inlined_call_operand.hbm [shape: f32[16,32], index: 0, kind: input, shape index: {}]
  %s1 = inlined_call_operand.hbm [shape: f32[32,64], index: 1, kind: input, shape index: {}]
  %s2 = inlined_call_operand.vmem [shape: f32[1,64], index: 2, kind: input, shape index: {}]
  %s3 = inlined_call_operand.hbm [shape: f32[16,64], index: 3, kind: output, shape index: {}]
  %s4 = sld [smem:[#allocation0]]
  $region38: #{pallas_linear.1} parent=0
    _
  %s6 = ssub.s32 1, %s4
  %s7 = scalar_select 0, %s6, %s4
  $region1: #{pallas_linear.1} parent=0
    #allocation2 [shape = 'u8[8192]{0}', space=vmem, size = 0x2000, scoped, tag = 'input window, operand 0, single buffered']
    #allocation3 [shape = 's32[1]{0}', space=sflag, size = 0x4, scoped, tag = 'scoped memory for pallas_linear.1']
    #allocation4 [shape = 's32[1]{0}', space=sflag, size = 0x4, scoped, tag = 'scoped memory for pallas_linear.1']
    #allocation5 [shape = 'u8[16384]{0}', space=vmem, size = 0x4000, scoped, tag = 'input window, operand 1, single buffered']
    #allocation6 [shape = 's32[1]{0}', space=sflag, size = 0x4, scoped, tag = 'scoped memory for pallas_linear.1']
    #allocation7 [shape = 'u8[8192]{0}', space=vmem, size = 0x2000, scoped, tag = 'output window, operand 0, single buffered']
    %8 = vsyncpa [#allocation3], 0
    %9 = vsyncpa [#allocation6], 0
    %10 = vsyncpa [#allocation4], 0
    // Predicated region
    $region2: #{pallas_linear.1} parent=1 // pred_check
      _
    $region3: #{pallas_linear.1} parent=1 // pred_check_branch
      %12 = sbr.rel (0) target = $region5
    $region4: #{pallas_linear.1} parent=1 // pred_region
      %14 = vsyncadd [#allocation3], 0
      %s15 = sshll.u32 %s0, 4
      %s16 = int_to_ptr.hbm [resolvable:$true] %s15
      %s17 = sshll.u32 [#allocation2], 4
      %s18 = int_to_ptr.vmem [resolvable:$true] %s17
      %23 = dma.hbm_to_vmem [thread:$0]  %s16, 256, %s18, [#allocation3], 128, 128, 8
    $region5: #{pallas_linear.1} parent=1 // pred_fallthru
      _
    // Predicated region
    $region6: #{pallas_linear.1} parent=1 // pred_check
      _
    $region7: #{pallas_linear.1} parent=1 // pred_check_branch
      %25 = sbr.rel (0) target = $region9
    $region8: #{pallas_linear.1} parent=1 // pred_region
      %27 = vsyncadd [#allocation6], 0
      %s28 = sshll.u32 %s1, 4
      %s29 = int_to_ptr.hbm [resolvable:$true] %s28
      %s30 = sshll.u32 [#allocation5], 4
      %s31 = int_to_ptr.vmem [resolvable:$true] %s30
      %36 = dma.hbm_to_vmem [thread:$0]  %s29, 512, %s31, [#allocation6], 128, 128, 8
    $region9: #{pallas_linear.1} parent=1 // pred_fallthru
      _
    // Predicated region
    $region10: #{pallas_linear.1} parent=1 // pred_check
      _
    $region11: #{pallas_linear.1} parent=1 // pred_check_branch
      %38 = sbr.rel (0) target = $region13
    $region12: #{pallas_linear.1} parent=1 // pred_region
      _
    $region13: #{pallas_linear.1} parent=1 // pred_fallthru
      _
    // Predicated region
    $region14: #{pallas_linear.1} parent=1 // pred_check
      _
    $region15: #{pallas_linear.1} parent=1 // pred_check_branch
      %40 = sbr.rel (0) target = $region17
    $region16: #{pallas_linear.1} parent=1 // pred_region
      %42 = dma.done [#allocation3], 256
    $region17: #{pallas_linear.1} parent=1 // pred_fallthru
      _
    // Predicated region
    $region18: #{pallas_linear.1} parent=1 // pred_check
      _
    $region19: #{pallas_linear.1} parent=1 // pred_check_branch
      %44 = sbr.rel (0) target = $region21
    $region20: #{pallas_linear.1} parent=1 // pred_region
      %46 = dma.done [#allocation6], 512
    $region21: #{pallas_linear.1} parent=1 // pred_fallthru
      _
    %p47 = scmp.eq.s32.totalorder 0, 0
    // Predicated region
    $region22: #{pallas_linear.1} parent=1 // pred_check
      %p48 = pneg %p47
    $region23: #{pallas_linear.1} parent=1 // pred_check_branch
      %50 = sbr.rel (%p48) target = $region25
    $region24: #{pallas_linear.1} parent=1 // pred_region
      %vm51 = vcmask 523264
      %52 = vst.msk [vmem:[#allocation7] sm:$0xff] %vm51, 0.0
      %53 = vst.msk [vmem:[#allocation7 + $0x8] sm:$0xff] %vm51, 0.0
    $region25: #{pallas_linear.1} parent=1 // pred_fallthru
      _
    %v54 = vld [vmem:[#allocation2] sm:$0xff]
    %v55 = vld [vmem:[#allocation2 + $0x8] sm:$0xff]
    %v56 = vld [vmem:[#allocation5] sm:$0xff]
    %v57 = vld [vmem:[#allocation5 + $0x8] sm:$0xff]
    %v58 = vld [vmem:[#allocation5 + $0x10] sm:$0xff]
    %v59 = vld [vmem:[#allocation5 + $0x18] sm:$0xff]
    %v60 = vld [vmem:[#allocation7] sm:$0xff]
    %v61 = vld [vmem:[#allocation7 + $0x8] sm:$0xff]
    %vm62 = vcmask 261120
    %v64 = vsel %vm62, %v54, 0
    %v67 = vsel %vm62, %v55, 0
    %69 = vmatpush.msra.mxu0 0.0
    %70 = vmatpush.msra.mxu0 0.0
    %71 = vmatpush.msra.mxu0 0.0
    %72 = vmatpush.msra.mxu0 0.0
    %73 = vmatpush.msra.mxu0 0.0
    %74 = vmatpush.msra.mxu0 0.0
    %75 = vmatpush.msra.mxu0 0.0
    %76 = vmatpush.msra.mxu0 0.0
    %77 = vmatpush.msra.mxu0 0.0
    %78 = vmatpush.msra.mxu0 0.0
    %79 = vmatpush.msra.mxu0 0.0
    %80 = vmatpush.msra.mxu0 0.0
    %81 = vmatpush.msra.mxu0 %v59
    %82 = vmatpush.msra.mxu0 %v58
    %83 = vmatpush.msra.mxu0 %v57
    %84 = vmatpush.msra.mxu0 %v56
    %85 = vmatmul.f32.gmra.mxu0 %v64
    %v86 = vpop.f32.mrf.mxu0
    %v87 = vadd.f32 0.0, %v86
    %88 = vmatmul.f32.gmra.mxu0 %v67
    %v89 = vpop.f32.mrf.mxu0
    %v90 = vadd.f32 0.0, %v89
    %91 = vdwg.mxu0
    %v92 = vadd.f32 %v60, %v87
    %v93 = vadd.f32 %v61, %v90
    %vm94 = vcmask 523264
    %95 = vst.msk [vmem:[#allocation7] sm:$0xff] %vm94, %v92
    %96 = vst.msk [vmem:[#allocation7 + $0x8] sm:$0xff] %vm94, %v93
    // Predicated region
    $region26: #{pallas_linear.1} parent=1 // pred_check
      %p97 = pneg %p47
    $region27: #{pallas_linear.1} parent=1 // pred_check_branch
      %99 = sbr.rel (%p97) target = $region29
    $region28: #{pallas_linear.1} parent=1 // pred_region
      %v100 = vld [vmem:[#allocation7] sm:$0xff]
      %v101 = vld [vmem:[#allocation7 + $0x8] sm:$0xff]
      %v102 = vld [vmem:[%s2] sm:$0x1]
      %v104 = vperm.slane %v102, 0
      %v106 = vadd.f32 %v100, %v104
      %v107 = vadd.f32 %v101, %v104
      %108 = vst.msk [vmem:[#allocation7] sm:$0xff] %vm94, %v106
      %109 = vst.msk [vmem:[#allocation7 + $0x8] sm:$0xff] %vm94, %v107
    $region29: #{pallas_linear.1} parent=1 // pred_fallthru
      _
    // Predicated region
    $region30: #{pallas_linear.1} parent=1 // pred_check
      _
    $region31: #{pallas_linear.1} parent=1 // pred_check_branch
      %111 = sbr.rel (0) target = $region33
    $region32: #{pallas_linear.1} parent=1 // pred_region
      %113 = vsyncadd [#allocation4], 0
      %s114 = sshll.u32 [#allocation7], 4
      %s115 = int_to_ptr.vmem [resolvable:$true] %s114
      %s116 = sshll.u32 %s3, 4
      %s117 = int_to_ptr.hbm [resolvable:$true] %s116
      %122 = dma.vmem_to_hbm [thread:$0]  %s115, 256, %s117, [#allocation4], 128, 128, 8
    $region33: #{pallas_linear.1} parent=1 // pred_fallthru
      _
    // Predicated region
    $region34: #{pallas_linear.1} parent=1 // pred_check
      _
    $region35: #{pallas_linear.1} parent=1 // pred_check_branch
      %124 = sbr.rel (0) target = $region37
    $region36: #{pallas_linear.1} parent=1 // pred_region
      %126 = dma.done [#allocation4], 256
    $region37: #{pallas_linear.1} parent=1 // pred_fallthru
      _
    %127 = vsyncpa [#allocation3], 1
    %128 = vsyncpa [#allocation6], 1
    %129 = vsyncpa [#allocation4], 1

</llo_original>
